<compile_context>
chip_gen: v7x
topology: tpu7x:2x2x1
jax: 0.10.0
libtpu: 0.0.40
codegen_flags: <defaults>
</compile_context>

<pallas_src>
import functools

import jax
import jax.numpy as jnp
from jax.experimental import pallas as pl
from jax.experimental.pallas import tpu as pltpu


HIDDEN = 512  # fixed by the module definition (fc1 width)


def _round_up(x: int, m: int) -> int:
    return ((x + m - 1) // m) * m


def _mlp_kernel(x_ref, w1_ref, b1_ref, w2_ref, b2_ref, o_ref):
    # fc1: cast activations to bf16 at the MXU input (cheap VPU work hidden
    # under the matmul); accumulate in f32.
    x = x_ref[...].astype(jnp.bfloat16)
    h = jnp.dot(x, w1_ref[...], preferred_element_type=jnp.float32)
    # bias + ReLU in f32 on the accumulator.
    h = jnp.maximum(h + b1_ref[...], 0.0)
    # Dropout(p=0.6): identity in eval mode (see TODO at top of file).
    # fc2: (TB, 512) @ (512, Cp), bf16 operands, f32 accumulation.
    out = jnp.dot(h.astype(jnp.bfloat16), w2_ref[...],
                  preferred_element_type=jnp.float32)
    o_ref[...] = (out + b2_ref[...]).astype(o_ref.dtype)


def prepare_params(w1, b1, w2, b2):
    """One-time (model-load) weight prep: bf16 cast + lane-dense class padding.

    Weights are stored (in_features, out_features), i.e. transposed vs PyTorch.
    Keeping this out of the per-call jitted forward removes the repeated
    pad/cast HBM passes (the op is weight-bandwidth-bound at small batch).
    """
    dim, hidden = w1.shape
    assert hidden == HIDDEN
    num_classes = w2.shape[1]
    c_p = _round_up(num_classes, 128)       # lane-dense output, full MXU columns

    w1_b = w1.astype(jnp.bfloat16)                                   # (dim, 512)
    b1_2d = b1.reshape(1, hidden).astype(jnp.float32)                # (1, 512)
    w2_p = jnp.zeros((hidden, c_p), jnp.bfloat16).at[:, :num_classes].set(
        w2.astype(jnp.bfloat16))                                     # (512, Cp)
    b2_2d = jnp.zeros((1, c_p), jnp.float32).at[:, :num_classes].set(
        b2.astype(jnp.float32))                                      # (1, Cp)
    return w1_b, b1_2d, w2_p, b2_2d


@functools.partial(jax.jit, static_argnames=("num_classes",))
def hdcnn_classifier_forward(x, w1_b, b1_2d, w2_p, b2_2d, *, num_classes):
    """x: (B, dim) f32; prepared params from `prepare_params`."""
    B, dim = x.shape
    hidden = w1_b.shape[1]
    c_p = w2_p.shape[1]

    # Batch tiling: 512-wide tiles when B scales (per-grid-step overhead
    # ~0.35us; 512 reaches ~85% of HBM roofline vs ~63% at 256), otherwise a
    # single sublane-rounded tile.  x stays unpadded; the edge block is
    # partial and the padded output rows are sliced away below.
    if B <= 512:
        TB = _round_up(B, 8)
    else:
        TB = 512
    n_tiles = pl.cdiv(B, TB)
    b_p = n_tiles * TB

    # Explicit VMEM budget: x/out tiles double-buffered, resident weights
    # single-buffered, plus headroom for the f32 h slab and bf16 casts.
    vmem_est = (2 * TB * dim * 4            # x tiles (f32)
                + 2 * TB * c_p * 4          # out tiles (f32)
                + dim * hidden * 2          # resident w1 (bf16, 1 buffer)
                + hidden * c_p * 2          # resident w2 (bf16, 1 buffer)
                + (hidden + c_p) * 4        # biases (f32)
                + TB * hidden * (4 + 2)     # h f32 + bf16 cast
                + TB * dim * 2)             # bf16 cast of x
    vmem_limit = int(min(max(2 * vmem_est, 24 * 2**20), 100 * 2**20))

    cost = pl.CostEstimate(
        flops=2 * B * (dim * hidden + hidden * c_p),
        transcendentals=0,
        bytes_accessed=(x.size * 4 + w1_b.size * 2 + w2_p.size * 2
                        + b1_2d.size * 4 + b2_2d.size * 4 + b_p * c_p * 4),
    )

    # Grid-constant (VMEM-resident) operands: single-buffered.
    resident = functools.partial(pl.BlockSpec,
                                 index_map=lambda i: (0, 0),
                                 pipeline_mode=pl.Buffered(1))

    out_p = pl.pallas_call(
        _mlp_kernel,
        out_shape=jax.ShapeDtypeStruct((b_p, c_p), jnp.float32),
        grid=(n_tiles,),
        in_specs=[
            pl.BlockSpec((TB, dim), lambda i: (i, 0)),   # x tile (f32, unpadded)
            resident((dim, hidden)),                     # w1
            resident((1, hidden)),                       # b1
            resident((hidden, c_p)),                     # w2
            resident((1, c_p)),                          # b2
        ],
        out_specs=pl.BlockSpec((TB, c_p), lambda i: (i, 0)),
        compiler_params=pltpu.CompilerParams(
            dimension_semantics=("parallel",),
            vmem_limit_bytes=vmem_limit),
        cost_estimate=cost,
    )(x, w1_b, b1_2d, w2_p, b2_2d)

    return out_p[:B, :num_classes]


def _reference(x, w1, b1, w2, b2):
    h = jnp.maximum(x @ w1 + b1, 0.0)
    return h @ w2 + b2


if __name__ == "__main__":
    key = jax.random.PRNGKey(0)
    k_x, k_w1, k_b1, k_w2, k_b2 = jax.random.split(key, 5)

    B = 2            # batch
    DIM = 64         # input feature dim
    NUM_CLASSES = 10

    # Deterministic parameter init (PyTorch-style uniform fan-in scaling).
    x = jax.random.normal(k_x, (B, DIM), dtype=jnp.float32)
    lim1 = 1.0 / (DIM ** 0.5)
    w1 = jax.random.uniform(k_w1, (DIM, HIDDEN), jnp.float32, -lim1, lim1)
    b1 = jax.random.uniform(k_b1, (HIDDEN,), jnp.float32, -lim1, lim1)
    lim2 = 1.0 / (HIDDEN ** 0.5)
    w2 = jax.random.uniform(k_w2, (HIDDEN, NUM_CLASSES), jnp.float32, -lim2, lim2)
    b2 = jax.random.uniform(k_b2, (NUM_CLASSES,), jnp.float32, -lim2, lim2)

    # One-time weight prep (model-load time), then the fused forward.
    params = prepare_params(w1, b1, w2, b2)
    out = hdcnn_classifier_forward(x, *params, num_classes=NUM_CLASSES)
    out = jax.block_until_ready(out)

    ref = _reference(x, w1, b1, w2, b2)
    assert out.shape == (B, NUM_CLASSES)
    # Tolerance loosened vs the f32 reference because matmul operands are bf16
    # (f32 MXU accumulation).
    assert jnp.allclose(out, ref, atol=5e-2, rtol=5e-2), "mismatch vs reference"

    print("KERNEL_OK")
</pallas_src>

<mosaic_0001>
module attributes {stable_mosaic.version = 11 : i64} {
  func.func @_mlp_kernel(%arg0: i32, %arg1: memref<8x64xf32, #tpu.memory_space<vmem>>, %arg2: memref<64x512xbf16, #tpu.memory_space<vmem>>, %arg3: memref<1x512xf32, #tpu.memory_space<vmem>>, %arg4: memref<512x128xbf16, #tpu.memory_space<vmem>>, %arg5: memref<1x128xf32, #tpu.memory_space<vmem>>, %arg6: memref<8x128xf32, #tpu.memory_space<vmem>>) attributes {dimension_semantics = [#tpu.dimension_semantics<parallel>], iteration_bounds = array<i64: 1>, scalar_prefetch = 0 : i64, scratch_operands = 0 : i64, tpu.core_type = #tpu.core_type<tc>, window_params = [{transform_indices = @transform_0, window_bounds = array<i64: 8, 64>}, {pipeline_mode = #tpu.pipeline_mode<synchronous>, transform_indices = @transform_1, window_bounds = array<i64: 64, 512>}, {pipeline_mode = #tpu.pipeline_mode<synchronous>, transform_indices = @transform_2, window_bounds = array<i64: 1, 512>}, {pipeline_mode = #tpu.pipeline_mode<synchronous>, transform_indices = @transform_3, window_bounds = array<i64: 512, 128>}, {pipeline_mode = #tpu.pipeline_mode<synchronous>, transform_indices = @transform_4, window_bounds = array<i64: 1, 128>}, {transform_indices = @transform_5, window_bounds = array<i64: 8, 128>}]} {
    %c0 = arith.constant 0 : index
    %c0_0 = arith.constant 0 : index
    %0 = vector.load %arg1[%c0, %c0_0] : memref<8x64xf32, #tpu.memory_space<vmem>>, vector<8x64xf32>
    %1 = arith.truncf %0 : vector<8x64xf32> to vector<8x64xbf16>
    %c0_1 = arith.constant 0 : index
    %c0_2 = arith.constant 0 : index
    %2 = vector.load %arg2[%c0_1, %c0_2] : memref<64x512xbf16, #tpu.memory_space<vmem>>, vector<64x512xbf16>
    %cst = arith.constant dense<0.000000e+00> : vector<8x512xf32>
    %3 = tpu.matmul %1, %2, %cst {dimension_numbers = #tpu.dot_dimension_numbers<[1], [0], [0], [1], [0, 0, 1, 1], [], []>} : vector<8x64xbf16>, vector<64x512xbf16>, vector<8x512xf32> -> vector<8x512xf32>
    %c0_3 = arith.constant 0 : index
    %c0_4 = arith.constant 0 : index
    %4 = vector.load %arg3[%c0_3, %c0_4] : memref<1x512xf32, #tpu.memory_space<vmem>>, vector<1x512xf32>
    %5 = vector.broadcast %4 : vector<1x512xf32> to vector<8x512xf32>
    %6 = arith.addf %3, %5 : vector<8x512xf32>
    %cst_5 = arith.constant 0.000000e+00 : f32
    %7 = vector.broadcast %cst_5 : f32 to vector<8x512xf32>
    %8 = arith.maximumf %6, %7 : vector<8x512xf32>
    %9 = arith.truncf %8 : vector<8x512xf32> to vector<8x512xbf16>
    %c0_6 = arith.constant 0 : index
    %c0_7 = arith.constant 0 : index
    %10 = vector.load %arg4[%c0_6, %c0_7] : memref<512x128xbf16, #tpu.memory_space<vmem>>, vector<512x128xbf16>
    %cst_8 = arith.constant dense<0.000000e+00> : vector<8x128xf32>
    %11 = tpu.matmul %9, %10, %cst_8 {dimension_numbers = #tpu.dot_dimension_numbers<[1], [0], [0], [1], [0, 0, 1, 1], [], []>} : vector<8x512xbf16>, vector<512x128xbf16>, vector<8x128xf32> -> vector<8x128xf32>
    %c0_9 = arith.constant 0 : index
    %c0_10 = arith.constant 0 : index
    %12 = vector.load %arg5[%c0_9, %c0_10] : memref<1x128xf32, #tpu.memory_space<vmem>>, vector<1x128xf32>
    %13 = vector.broadcast %12 : vector<1x128xf32> to vector<8x128xf32>
    %14 = arith.addf %11, %13 : vector<8x128xf32>
    %c0_11 = arith.constant 0 : index
    %c0_12 = arith.constant 0 : index
    %15 = vector.load %arg6[%c0_11, %c0_12] : memref<8x128xf32, #tpu.memory_space<vmem>>, vector<8x128xf32>
    tpu.vector_store %arg6[%c0_11, %c0_12], %14 {strides = array<i32>} : memref<8x128xf32, #tpu.memory_space<vmem>>, vector<8x128xf32>,
    return
  }
  func.func @transform_0(%arg0: i32) -> (i32, i32) {
    %c0_i32 = arith.constant 0 : i32
    %c0_i32_0 = arith.constant 0 : i32
    return %arg0, %c0_i32 : i32, i32
  }
  func.func @transform_1(%arg0: i32) -> (i32, i32) {
    %c0_i32 = arith.constant 0 : i32
    %c0_i32_0 = arith.constant 0 : i32
    %c0_i32_1 = arith.constant 0 : i32
    return %c0_i32, %c0_i32_0 : i32, i32
  }
  func.func @transform_2(%arg0: i32) -> (i32, i32) {
    %c0_i32 = arith.constant 0 : i32
    %c0_i32_0 = arith.constant 0 : i32
    %c0_i32_1 = arith.constant 0 : i32
    return %c0_i32, %c0_i32_0 : i32, i32
  }
  func.func @transform_3(%arg0: i32) -> (i32, i32) {
    %c0_i32 = arith.constant 0 : i32
    %c0_i32_0 = arith.constant 0 : i32
    %c0_i32_1 = arith.constant 0 : i32
    return %c0_i32, %c0_i32_0 : i32, i32
  }
  func.func @transform_4(%arg0: i32) -> (i32, i32) {
    %c0_i32 = arith.constant 0 : i32
    %c0_i32_0 = arith.constant 0 : i32
    %c0_i32_1 = arith.constant 0 : i32
    return %c0_i32, %c0_i32_0 : i32, i32
  }
  func.func @transform_5(%arg0: i32) -> (i32, i32) {
    %c0_i32 = arith.constant 0 : i32
    %c0_i32_0 = arith.constant 0 : i32
    return %arg0, %c0_i32 : i32, i32
  }
}

</mosaic_0001>

<llo_original>
// kernel: hdcnn_classifier_forward.1
$region0: #{hdcnn_classifier_forward.1}
  #allocation0 [shape = 'u32[]', space=smem, size = 0x4, offset = 0x4, fixed_abs, tag = 'smem constant byte address 0x4 - core index']
  #allocation1 [shape = 'u32[144,128]{1,0:T(1,128)}', space=vmem, size = 0x12000, scoped, tag = 'internal scratch']
  %s0 = inlined_call_operand.hbm [shape: f32[2,64], index: 0, kind: input, shape index: {}]
  %s1 = inlined_call_operand.hbm [shape: bf16[64,512], index: 1, kind: input, shape index: {}]
  %s2 = inlined_call_operand.vmem [shape: f32[1,512], index: 2, kind: input, shape index: {}]
  %s3 = inlined_call_operand.hbm [shape: bf16[512,128], index: 3, kind: input, shape index: {}]
  %s4 = inlined_call_operand.vmem [shape: f32[1,128], index: 4, kind: input, shape index: {}]
  %s5 = inlined_call_operand.vmem [shape: f32[8,128], index: 5, kind: output, shape index: {}]
  %s6 = sld [smem:[#allocation0]]
  $region42: #{hdcnn_classifier_forward.1} parent=0
    _
  %s8 = ssub.s32 1, %s6
  %s9 = scalar_select 0, %s8, %s6
  $region1: #{hdcnn_classifier_forward.1} parent=0
    #allocation2 [shape = 'u8[4096]{0}', space=vmem, size = 0x1000, scoped, tag = 'input window, operand 0, single buffered']
    #allocation3 [shape = 's32[1]{0}', space=sflag, size = 0x4, scoped, tag = 'scoped memory for hdcnn_classifier_forward.1']
    #allocation4 [shape = 'u8[65536]{0}', space=vmem, size = 0x10000, scoped, tag = 'input window, operand 1, single buffered']
    #allocation5 [shape = 's32[1]{0}', space=sflag, size = 0x4, scoped, tag = 'scoped memory for hdcnn_classifier_forward.1']
    #allocation6 [shape = 'u8[131072]{0}', space=vmem, size = 0x20000, scoped, tag = 'input window, operand 3, single buffered']
    %10 = vsyncpa [#allocation3], 0
    %11 = vsyncpa [#allocation5], 0
    // Predicated region
    $region2: #{hdcnn_classifier_forward.1} parent=1 // pred_check
      _
    $region3: #{hdcnn_classifier_forward.1} parent=1 // pred_check_branch
      %13 = sbr.rel (0) target = $region5
    $region4: #{hdcnn_classifier_forward.1} parent=1 // pred_region
      %s15 = ssub.s32 128, 32
      %16 = vsyncadd [#allocation3], %s15
      %s17 = sshll.u32 [#allocation2], 4
      %s18 = int_to_ptr.vmem [resolvable:$true] %s17
      %23 = dma.hbm_to_vmem [thread:$0]  %s0, 32, %s18, [#allocation3], 32, 32, 2
    $region5: #{hdcnn_classifier_forward.1} parent=1 // pred_fallthru
      _
    // Predicated region
    $region6: #{hdcnn_classifier_forward.1} parent=1 // pred_check
      _
    $region7: #{hdcnn_classifier_forward.1} parent=1 // pred_check_branch
      %25 = sbr.rel (0) target = $region9
    $region8: #{hdcnn_classifier_forward.1} parent=1 // pred_region
      %s27 = ssub.s32 2048, 2048
      %28 = vsyncadd [#allocation5], %s27
      %s29 = sshll.u32 [#allocation4], 4
      %s30 = int_to_ptr.vmem [resolvable:$true] %s29
      %35 = dma.hbm_to_vmem [thread:$0]  %s1, 2048, %s30, [#allocation5], 256, 256, 16
    $region9: #{hdcnn_classifier_forward.1} parent=1 // pred_fallthru
      _
    // Predicated region
    $region10: #{hdcnn_classifier_forward.1} parent=1 // pred_check
      _
    $region11: #{hdcnn_classifier_forward.1} parent=1 // pred_check_branch
      %37 = sbr.rel (0) target = $region13
    $region12: #{hdcnn_classifier_forward.1} parent=1 // pred_region
      _
    $region13: #{hdcnn_classifier_forward.1} parent=1 // pred_fallthru
      _
    // Predicated region
    $region14: #{hdcnn_classifier_forward.1} parent=1 // pred_check
      _
    $region15: #{hdcnn_classifier_forward.1} parent=1 // pred_check_branch
      %39 = sbr.rel (0) target = $region17
    $region16: #{hdcnn_classifier_forward.1} parent=1 // pred_region
      %s41 = ssub.s32 4096, 4096
      %42 = vsyncadd [#allocation5], %s41
      %s43 = sshll.u32 [#allocation6], 4
      %s44 = int_to_ptr.vmem [resolvable:$true] %s43
      %49 = dma.hbm_to_vmem [thread:$0]  %s3, 4096, %s44, [#allocation5], 64, 64, 4
    $region17: #{hdcnn_classifier_forward.1} parent=1 // pred_fallthru
      _
    // Predicated region
    $region18: #{hdcnn_classifier_forward.1} parent=1 // pred_check
      _
    $region19: #{hdcnn_classifier_forward.1} parent=1 // pred_check_branch
      %51 = sbr.rel (0) target = $region21
    $region20: #{hdcnn_classifier_forward.1} parent=1 // pred_region
      _
    $region21: #{hdcnn_classifier_forward.1} parent=1 // pred_fallthru
      _
    // Predicated region
    $region22: #{hdcnn_classifier_forward.1} parent=1 // pred_check
      _
    $region23: #{hdcnn_classifier_forward.1} parent=1 // pred_check_branch
      %53 = sbr.rel (0) target = $region25
    $region24: #{hdcnn_classifier_forward.1} parent=1 // pred_region
      %54 = dma.done [#allocation3], 128
    $region25: #{hdcnn_classifier_forward.1} parent=1 // pred_fallthru
      _
    // Predicated region
    $region26: #{hdcnn_classifier_forward.1} parent=1 // pred_check
      _
    $region27: #{hdcnn_classifier_forward.1} parent=1 // pred_check_branch
      %56 = sbr.rel (0) target = $region29
    $region28: #{hdcnn_classifier_forward.1} parent=1 // pred_region
      %57 = dma.done [#allocation5], 2048
    $region29: #{hdcnn_classifier_forward.1} parent=1 // pred_fallthru
      _
    // Predicated region
    $region30: #{hdcnn_classifier_forward.1} parent=1 // pred_check
      _
    $region31: #{hdcnn_classifier_forward.1} parent=1 // pred_check_branch
      %59 = sbr.rel (0) target = $region33
    $region32: #{hdcnn_classifier_forward.1} parent=1 // pred_region
      %60 = dma.done [#allocation5], 4096
    $region33: #{hdcnn_classifier_forward.1} parent=1 // pred_fallthru
      _
    %v62 = vld [vmem:[#allocation2] sm:$0xff]
    %v63 = vpack.c.bf16 %v62, %v62
    %v64 = vld [vmem:[#allocation4] sm:$0xff]
    %v65 = vld [vmem:[#allocation4 + $0x8] sm:$0xff]
    %v66 = vld [vmem:[#allocation4 + $0x10] sm:$0xff]
    %v67 = vld [vmem:[#allocation4 + $0x18] sm:$0xff]
    %v68 = vld [vmem:[#allocation4 + $0x20] sm:$0xff]
    %v69 = vld [vmem:[#allocation4 + $0x28] sm:$0xff]
    %v70 = vld [vmem:[#allocation4 + $0x30] sm:$0xff]
    %v71 = vld [vmem:[#allocation4 + $0x38] sm:$0xff]
    %v72 = vld [vmem:[#allocation4 + $0x40] sm:$0xff]
    %v73 = vld [vmem:[#allocation4 + $0x48] sm:$0xff]
    %v74 = vld [vmem:[#allocation4 + $0x50] sm:$0xff]
    %v75 = vld [vmem:[#allocation4 + $0x58] sm:$0xff]
    %v76 = vld [vmem:[#allocation4 + $0x60] sm:$0xff]
    %v77 = vld [vmem:[#allocation4 + $0x68] sm:$0xff]
    %v78 = vld [vmem:[#allocation4 + $0x70] sm:$0xff]
    %v79 = vld [vmem:[#allocation4 + $0x78] sm:$0xff]
    %v80 = vld [vmem:[%s2] sm:$0xf]
    %v82 = vlaneseq
    %v83 = vshrl.u32 %v82, 7
    %v84 = vsub.s32 0, %v83
    %v85 = vrot.slane %v80, %v84
    %v86 = vlaneseq
    %v87 = vshrl.u32 %v86, 7
    %v88 = vsub.s32 1, %v87
    %v89 = vrot.slane %v80, %v88
    %v90 = vlaneseq
    %v91 = vshrl.u32 %v90, 7
    %v92 = vsub.s32 2, %v91
    %v93 = vrot.slane %v80, %v92
    %v94 = vlaneseq
    %v95 = vshrl.u32 %v94, 7
    %v96 = vsub.s32 3, %v95
    %v97 = vrot.slane %v80, %v96
    %v118 = vunpack.c.l.b16 %v64
    %v119 = vunpack.c.h.b16 %v64
    %v120 = vunpack.c.l.b16 %v65
    %v121 = vunpack.c.h.b16 %v65
    %v122 = vunpack.c.l.b16 %v66
    %v123 = vunpack.c.h.b16 %v66
    %v124 = vunpack.c.l.b16 %v67
    %v125 = vunpack.c.h.b16 %v67
    %v126 = vunpack.c.l.b16 %v68
    %v127 = vunpack.c.h.b16 %v68
    %v128 = vunpack.c.l.b16 %v69
    %v129 = vunpack.c.h.b16 %v69
    %v130 = vunpack.c.l.b16 %v70
    %v131 = vunpack.c.h.b16 %v70
    %v132 = vunpack.c.l.b16 %v71
    %v133 = vunpack.c.h.b16 %v71
    %v134 = vunpack.c.l.b16 %v72
    %v135 = vunpack.c.h.b16 %v72
    %v136 = vunpack.c.l.b16 %v73
    %v137 = vunpack.c.h.b16 %v73
    %v138 = vunpack.c.l.b16 %v74
    %v139 = vunpack.c.h.b16 %v74
    %v140 = vunpack.c.l.b16 %v75
    %v141 = vunpack.c.h.b16 %v75
    %v142 = vunpack.c.l.b16 %v76
    %v143 = vunpack.c.h.b16 %v76
    %v144 = vunpack.c.l.b16 %v77
    %v145 = vunpack.c.h.b16 %v77
    %v146 = vunpack.c.l.b16 %v78
    %v147 = vunpack.c.h.b16 %v78
    %v148 = vunpack.c.l.b16 %v79
    %v149 = vunpack.c.h.b16 %v79
    %v150 = vpack.c.b16 %v122, %v118
    %v151 = vpack.c.b16 %v123, %v119
    %v152 = vpack.c.b16 %v124, %v120
    %v153 = vpack.c.b16 %v125, %v121
    %v154 = vpack.c.b16 %v130, %v126
    %v155 = vpack.c.b16 %v131, %v127
    %v156 = vpack.c.b16 %v132, %v128
    %v157 = vpack.c.b16 %v133, %v129
    %v158 = vpack.c.b16 %v138, %v134
    %v159 = vpack.c.b16 %v139, %v135
    %v160 = vpack.c.b16 %v140, %v136
    %v161 = vpack.c.b16 %v141, %v137
    %v162 = vpack.c.b16 %v146, %v142
    %v163 = vpack.c.b16 %v147, %v143
    %v164 = vpack.c.b16 %v148, %v144
    %v165 = vpack.c.b16 %v149, %v145
    %vm182 = vcmask 523264
    %v184 = vsel %vm182, %v63, 0
    %186 = vmatprep.subr.bf16.mxu0 %v151
    %187 = vmatpush1.bf16.msra.mxu0 %v150
    %188 = vmatprep.subr.bf16.mxu0 %v155
    %189 = vmatpush1.bf16.msra.mxu0 %v154
    %190 = vmatprep.subr.bf16.mxu0 %v159
    %191 = vmatpush1.bf16.msra.mxu0 %v158
    %192 = vmatprep.subr.bf16.mxu0 %v163
    %193 = vmatpush1.bf16.msra.mxu0 %v162
    %194 = vmatprep.subr.bf16.mxu0 0
    %195 = vmatpush1.bf16.msra.mxu0 0
    %196 = vmatprep.subr.bf16.mxu0 0
    %197 = vmatpush1.bf16.msra.mxu0 0
    %198 = vmatprep.subr.bf16.mxu0 0
    %199 = vmatpush1.bf16.msra.mxu0 0
    %200 = vmatprep.subr.bf16.mxu0 0
    %201 = vmatpush1.bf16.msra.mxu0 0
    %202 = vmatprep.subr.bf16.mxu0 0
    %203 = vmatpush1.bf16.msra.mxu0 0
    %204 = vmatprep.subr.bf16.mxu0 0
    %205 = vmatpush1.bf16.msra.mxu0 0
    %206 = vmatprep.subr.bf16.mxu0 0
    %207 = vmatpush1.bf16.msra.mxu0 0
    %208 = vmatprep.subr.bf16.mxu0 0
    %209 = vmatpush1.bf16.msra.mxu0 0
    %210 = vmatprep.subr.bf16.mxu0 0
    %211 = vmatpush1.bf16.msra.mxu0 0
    %212 = vmatprep.subr.bf16.mxu0 0
    %213 = vmatpush1.bf16.msra.mxu0 0
    %214 = vmatprep.subr.bf16.mxu0 0
    %215 = vmatpush1.bf16.msra.mxu0 0
    %216 = vmatprep.subr.bf16.mxu0 0
    %217 = vmatpush1.bf16.msra.mxu0 0
    %218 = vmatprep.mubr.bf16.mxu0 0
    %219 = vmatmul.mubr.bf16.gmra.mrb[0].mxu0 %v184
    %v220 = vpop.f32.mrb[0].mxu0
    %v221 = vadd.f32 %v85, %v220
    %v222 = vpop.f32.mrb[0].mxu0
    %v223 = vadd.f32 %v89, %v222
    %v224 = vpop.f32.mrb[0].mxu0
    %v225 = vpop.f32.mrb[0].mxu0
    %226 = vdwg.mxu0
    %227 = vmatprep.subr.bf16.mxu0 %v153
    %228 = vmatpush1.bf16.msra.mxu0 %v152
    %229 = vmatprep.subr.bf16.mxu0 %v157
    %230 = vmatpush1.bf16.msra.mxu0 %v156
    %231 = vmatprep.subr.bf16.mxu0 %v161
    %232 = vmatpush1.bf16.msra.mxu0 %v160
    %233 = vmatprep.subr.bf16.mxu0 %v165
    %234 = vmatpush1.bf16.msra.mxu0 %v164
    %235 = vmatprep.subr.bf16.mxu0 0
    %236 = vmatpush1.bf16.msra.mxu0 0
    %237 = vmatprep.subr.bf16.mxu0 0
    %238 = vmatpush1.bf16.msra.mxu0 0
    %239 = vmatprep.subr.bf16.mxu0 0
    %240 = vmatpush1.bf16.msra.mxu0 0
    %241 = vmatprep.subr.bf16.mxu0 0
    %242 = vmatpush1.bf16.msra.mxu0 0
    %243 = vmatprep.subr.bf16.mxu0 0
    %244 = vmatpush1.bf16.msra.mxu0 0
    %245 = vmatprep.subr.bf16.mxu0 0
    %246 = vmatpush1.bf16.msra.mxu0 0
    %247 = vmatprep.subr.bf16.mxu0 0
    %248 = vmatpush1.bf16.msra.mxu0 0
    %249 = vmatprep.subr.bf16.mxu0 0
    %250 = vmatpush1.bf16.msra.mxu0 0
    %251 = vmatprep.subr.bf16.mxu0 0
    %252 = vmatpush1.bf16.msra.mxu0 0
    %253 = vmatprep.subr.bf16.mxu0 0
    %254 = vmatpush1.bf16.msra.mxu0 0
    %255 = vmatprep.subr.bf16.mxu0 0
    %256 = vmatpush1.bf16.msra.mxu0 0
    %257 = vmatprep.subr.bf16.mxu0 0
    %258 = vmatpush1.bf16.msra.mxu0 0
    %259 = vmatprep.mubr.bf16.mxu0 0
    %260 = vmatmul.mubr.bf16.gmra.mrb[0].mxu0 %v184
    %v261 = vpop.f32.mrb[0].mxu0
    %v262 = vadd.f32 %v93, %v261
    %v263 = vpop.f32.mrb[0].mxu0
    %v264 = vadd.f32 %v97, %v263
    %v265 = vpop.f32.mrb[0].mxu0
    %v266 = vpop.f32.mrb[0].mxu0
    %267 = vdwg.mxu0
    %v268 = vmax.f32 %v221, 0.0
    %v269 = vmax.f32 %v223, 0.0
    %v270 = vmax.f32 %v262, 0.0
    %v271 = vmax.f32 %v264, 0.0
    %v272 = vpack.c.bf16 %v268, %v268
    %v273 = vpack.c.bf16 %v269, %v269
    %v274 = vpack.c.bf16 %v270, %v270
    %v275 = vpack.c.bf16 %v271, %v271
    %v276 = vld [vmem:[#allocation6] sm:$0xf]
    %v277 = vld [vmem:[#allocation6 + $0x4] sm:$0xf]
    %v278 = vld [vmem:[#allocation6 + $0x8] sm:$0xf]
    %v279 = vld [vmem:[#allocation6 + $0xc] sm:$0xf]
    %v280 = vld [vmem:[#allocation6 + $0x10] sm:$0xf]
    %v281 = vld [vmem:[#allocation6 + $0x14] sm:$0xf]
    %v282 = vld [vmem:[#allocation6 + $0x18] sm:$0xf]
    %v283 = vld [vmem:[#allocation6 + $0x1c] sm:$0xf]
    %v284 = vld [vmem:[#allocation6 + $0x20] sm:$0xf]
    %v285 = vld [vmem:[#allocation6 + $0x24] sm:$0xf]
    %v286 = vld [vmem:[#allocation6 + $0x28] sm:$0xf]
    %v287 = vld [vmem:[#allocation6 + $0x2c] sm:$0xf]
    %v288 = vld [vmem:[#allocation6 + $0x30] sm:$0xf]
    %v289 = vld [vmem:[#allocation6 + $0x34] sm:$0xf]
    %v290 = vld [vmem:[#allocation6 + $0x38] sm:$0xf]
    %v291 = vld [vmem:[#allocation6 + $0x3c] sm:$0xf]
    %v292 = vld [vmem:[#allocation6 + $0x40] sm:$0xf]
    %v293 = vld [vmem:[#allocation6 + $0x44] sm:$0xf]
    %v294 = vld [vmem:[#allocation6 + $0x48] sm:$0xf]
    %v295 = vld [vmem:[#allocation6 + $0x4c] sm:$0xf]
    %v296 = vld [vmem:[#allocation6 + $0x50] sm:$0xf]
    %v297 = vld [vmem:[#allocation6 + $0x54] sm:$0xf]
    %v298 = vld [vmem:[#allocation6 + $0x58] sm:$0xf]
    %v299 = vld [vmem:[#allocation6 + $0x5c] sm:$0xf]
    %v300 = vld [vmem:[#allocation6 + $0x60] sm:$0xf]
    %v301 = vld [vmem:[#allocation6 + $0x64] sm:$0xf]
    %v302 = vld [vmem:[#allocation6 + $0x68] sm:$0xf]
    %v303 = vld [vmem:[#allocation6 + $0x6c] sm:$0xf]
    %v304 = vld [vmem:[#allocation6 + $0x70] sm:$0xf]
    %v305 = vld [vmem:[#allocation6 + $0x74] sm:$0xf]
    %v306 = vld [vmem:[#allocation6 + $0x78] sm:$0xf]
    %v307 = vld [vmem:[#allocation6 + $0x7c] sm:$0xf]
    %v308 = vld [vmem:[#allocation6 + $0x80] sm:$0xf]
    %v309 = vld [vmem:[#allocation6 + $0x84] sm:$0xf]
    %v310 = vld [vmem:[#allocation6 + $0x88] sm:$0xf]
    %v311 = vld [vmem:[#allocation6 + $0x8c] sm:$0xf]
    %v312 = vld [vmem:[#allocation6 + $0x90] sm:$0xf]
    %v313 = vld [vmem:[#allocation6 + $0x94] sm:$0xf]
    %v314 = vld [vmem:[#allocation6 + $0x98] sm:$0xf]
    %v315 = vld [vmem:[#allocation6 + $0x9c] sm:$0xf]
    %v316 = vld [vmem:[#allocation6 + $0xa0] sm:$0xf]
    %v317 = vld [vmem:[#allocation6 + $0xa4] sm:$0xf]
    %v318 = vld [vmem:[#allocation6 + $0xa8] sm:$0xf]
    %v319 = vld [vmem:[#allocation6 + $0xac] sm:$0xf]
    %v320 = vld [vmem:[#allocation6 + $0xb0] sm:$0xf]
    %v321 = vld [vmem:[#allocation6 + $0xb4] sm:$0xf]
    %v322 = vld [vmem:[#allocation6 + $0xb8] sm:$0xf]
    %v323 = vld [vmem:[#allocation6 + $0xbc] sm:$0xf]
    %v324 = vld [vmem:[#allocation6 + $0xc0] sm:$0xf]
    %v325 = vld [vmem:[#allocation6 + $0xc4] sm:$0xf]
    %v326 = vld [vmem:[#allocation6 + $0xc8] sm:$0xf]
    %v327 = vld [vmem:[#allocation6 + $0xcc] sm:$0xf]
    %v328 = vld [vmem:[#allocation6 + $0xd0] sm:$0xf]
    %v329 = vld [vmem:[#allocation6 + $0xd4] sm:$0xf]
    %v330 = vld [vmem:[#allocation6 + $0xd8] sm:$0xf]
    %v331 = vld [vmem:[#allocation6 + $0xdc] sm:$0xf]
    %v332 = vld [vmem:[#allocation6 + $0xe0] sm:$0xf]
    %v333 = vld [vmem:[#allocation6 + $0xe4] sm:$0xf]
    %v334 = vld [vmem:[#allocation6 + $0xe8] sm:$0xf]
    %v335 = vld [vmem:[#allocation6 + $0xec] sm:$0xf]
    %v336 = vld [vmem:[#allocation6 + $0xf0] sm:$0xf]
    %v337 = vld [vmem:[#allocation6 + $0xf4] sm:$0xf]
    %v338 = vld [vmem:[#allocation6 + $0xf8] sm:$0xf]
    %v339 = vld [vmem:[#allocation6 + $0xfc] sm:$0xf]
    %v340 = vld [vmem:[%s4] sm:$0x1]
    %v342 = vlaneseq
    %v343 = vshrl.u32 %v342, 7
    %v344 = vsub.s32 0, %v343
    %v345 = vrot.slane %v340, %v344
    %v411 = vunpack.c.l.b16 %v276
    %v412 = vunpack.c.l.b16 %v277
    %v413 = vunpack.c.l.b16 %v278
    %v414 = vunpack.c.l.b16 %v279
    %v415 = vunpack.c.l.b16 %v280
    %v416 = vunpack.c.l.b16 %v281
    %v417 = vunpack.c.l.b16 %v282
    %v418 = vunpack.c.l.b16 %v283
    %v419 = vunpack.c.l.b16 %v284
    %v420 = vunpack.c.l.b16 %v285
    %v421 = vunpack.c.l.b16 %v286
    %v422 = vunpack.c.l.b16 %v287
    %v423 = vunpack.c.l.b16 %v288
    %v424 = vunpack.c.l.b16 %v289
    %v425 = vunpack.c.l.b16 %v290
    %v426 = vunpack.c.l.b16 %v291
    %v427 = vunpack.c.l.b16 %v292
    %v428 = vunpack.c.l.b16 %v293
    %v429 = vunpack.c.l.b16 %v294
    %v430 = vunpack.c.l.b16 %v295
    %v431 = vunpack.c.l.b16 %v296
    %v432 = vunpack.c.l.b16 %v297
    %v433 = vunpack.c.l.b16 %v298
    %v434 = vunpack.c.l.b16 %v299
    %v435 = vunpack.c.l.b16 %v300
    %v436 = vunpack.c.l.b16 %v301
    %v437 = vunpack.c.l.b16 %v302
    %v438 = vunpack.c.l.b16 %v303
    %v439 = vunpack.c.l.b16 %v304
    %v440 = vunpack.c.l.b16 %v305
    %v441 = vunpack.c.l.b16 %v306
    %v442 = vunpack.c.l.b16 %v307
    %v443 = vunpack.c.l.b16 %v308
    %v444 = vunpack.c.l.b16 %v309
    %v445 = vunpack.c.l.b16 %v310
    %v446 = vunpack.c.l.b16 %v311
    %v447 = vunpack.c.l.b16 %v312
    %v448 = vunpack.c.l.b16 %v313
    %v449 = vunpack.c.l.b16 %v314
    %v450 = vunpack.c.l.b16 %v315
    %v451 = vunpack.c.l.b16 %v316
    %v452 = vunpack.c.l.b16 %v317
    %v453 = vunpack.c.l.b16 %v318
    %v454 = vunpack.c.l.b16 %v319
    %v455 = vunpack.c.l.b16 %v320
    %v456 = vunpack.c.l.b16 %v321
    %v457 = vunpack.c.l.b16 %v322
    %v458 = vunpack.c.l.b16 %v323
    %v459 = vunpack.c.l.b16 %v324
    %v460 = vunpack.c.l.b16 %v325
    %v461 = vunpack.c.l.b16 %v326
    %v462 = vunpack.c.l.b16 %v327
    %v463 = vunpack.c.l.b16 %v328
    %v464 = vunpack.c.l.b16 %v329
    %v465 = vunpack.c.l.b16 %v330
    %v466 = vunpack.c.l.b16 %v331
    %v467 = vunpack.c.l.b16 %v332
    %v468 = vunpack.c.l.b16 %v333
    %v469 = vunpack.c.l.b16 %v334
    %v470 = vunpack.c.l.b16 %v335
    %v471 = vunpack.c.l.b16 %v336
    %v472 = vunpack.c.l.b16 %v337
    %v473 = vunpack.c.l.b16 %v338
    %v474 = vunpack.c.l.b16 %v339
    %v475 = vpack.c.b16 %v412, %v411
    %v476 = vpack.c.b16 %v414, %v413
    %v477 = vpack.c.b16 %v416, %v415
    %v478 = vpack.c.b16 %v418, %v417
    %v479 = vpack.c.b16 %v420, %v419
    %v480 = vpack.c.b16 %v422, %v421
    %v481 = vpack.c.b16 %v424, %v423
    %v482 = vpack.c.b16 %v426, %v425
    %v483 = vpack.c.b16 %v428, %v427
    %v484 = vpack.c.b16 %v430, %v429
    %v485 = vpack.c.b16 %v432, %v431
    %v486 = vpack.c.b16 %v434, %v433
    %v487 = vpack.c.b16 %v436, %v435
    %v488 = vpack.c.b16 %v438, %v437
    %v489 = vpack.c.b16 %v440, %v439
    %v490 = vpack.c.b16 %v442, %v441
    %v491 = vpack.c.b16 %v444, %v443
    %v492 = vpack.c.b16 %v446, %v445
    %v493 = vpack.c.b16 %v448, %v447
    %v494 = vpack.c.b16 %v450, %v449
    %v495 = vpack.c.b16 %v452, %v451
    %v496 = vpack.c.b16 %v454, %v453
    %v497 = vpack.c.b16 %v456, %v455
    %v498 = vpack.c.b16 %v458, %v457
    %v499 = vpack.c.b16 %v460, %v459
    %v500 = vpack.c.b16 %v462, %v461
    %v501 = vpack.c.b16 %v464, %v463
    %v502 = vpack.c.b16 %v466, %v465
    %v503 = vpack.c.b16 %v468, %v467
    %v504 = vpack.c.b16 %v470, %v469
    %v505 = vpack.c.b16 %v472, %v471
    %v506 = vpack.c.b16 %v474, %v473
    %539 = vmatprep.subr.bf16.mxu0 0
    %540 = vmatpush1.bf16.msra.mxu0 %v475
    %541 = vmatprep.subr.bf16.mxu0 0
    %542 = vmatpush1.bf16.msra.mxu0 %v476
    %543 = vmatprep.subr.bf16.mxu0 0
    %544 = vmatpush1.bf16.msra.mxu0 %v477
    %545 = vmatprep.subr.bf16.mxu0 0
    %546 = vmatpush1.bf16.msra.mxu0 %v478
    %547 = vmatprep.subr.bf16.mxu0 0
    %548 = vmatpush1.bf16.msra.mxu0 %v479
    %549 = vmatprep.subr.bf16.mxu0 0
    %550 = vmatpush1.bf16.msra.mxu0 %v480
    %551 = vmatprep.subr.bf16.mxu0 0
    %552 = vmatpush1.bf16.msra.mxu0 %v481
    %553 = vmatprep.subr.bf16.mxu0 0
    %554 = vmatpush1.bf16.msra.mxu0 %v482
    %555 = vmatprep.subr.bf16.mxu0 0
    %556 = vmatpush1.bf16.msra.mxu0 %v483
    %557 = vmatprep.subr.bf16.mxu0 0
    %558 = vmatpush1.bf16.msra.mxu0 %v484
    %559 = vmatprep.subr.bf16.mxu0 0
    %560 = vmatpush1.bf16.msra.mxu0 %v485
    %561 = vmatprep.subr.bf16.mxu0 0
    %562 = vmatpush1.bf16.msra.mxu0 %v486
    %563 = vmatprep.subr.bf16.mxu0 0
    %564 = vmatpush1.bf16.msra.mxu0 %v487
    %565 = vmatprep.subr.bf16.mxu0 0
    %566 = vmatpush1.bf16.msra.mxu0 %v488
    %567 = vmatprep.subr.bf16.mxu0 0
    %568 = vmatpush1.bf16.msra.mxu0 %v489
    %569 = vmatprep.subr.bf16.mxu0 0
    %570 = vmatpush1.bf16.msra.mxu0 %v490
    %571 = vmatprep.mubr.bf16.mxu0 %v273
    %572 = vmatmul.mubr.bf16.gmra.mrb[0].mxu0 %v272
    %v573 = vpop.f32.mrb[0].mxu0
    %v574 = vadd.f32 %v345, %v573
    %v575 = vpop.f32.mrb[0].mxu0
    %v576 = vpop.f32.mrb[0].mxu0
    %v577 = vpop.f32.mrb[0].mxu0
    %578 = vdwg.mxu0
    %579 = vmatprep.subr.bf16.mxu0 0
    %580 = vmatpush1.bf16.msra.mxu0 %v491
    %581 = vmatprep.subr.bf16.mxu0 0
    %582 = vmatpush1.bf16.msra.mxu0 %v492
    %583 = vmatprep.subr.bf16.mxu0 0
    %584 = vmatpush1.bf16.msra.mxu0 %v493
    %585 = vmatprep.subr.bf16.mxu0 0
    %586 = vmatpush1.bf16.msra.mxu0 %v494
    %587 = vmatprep.subr.bf16.mxu0 0
    %588 = vmatpush1.bf16.msra.mxu0 %v495
    %589 = vmatprep.subr.bf16.mxu0 0
    %590 = vmatpush1.bf16.msra.mxu0 %v496
    %591 = vmatprep.subr.bf16.mxu0 0
    %592 = vmatpush1.bf16.msra.mxu0 %v497
    %593 = vmatprep.subr.bf16.mxu0 0
    %594 = vmatpush1.bf16.msra.mxu0 %v498
    %595 = vmatprep.subr.bf16.mxu0 0
    %596 = vmatpush1.bf16.msra.mxu0 %v499
    %597 = vmatprep.subr.bf16.mxu0 0
    %598 = vmatpush1.bf16.msra.mxu0 %v500
    %599 = vmatprep.subr.bf16.mxu0 0
    %600 = vmatpush1.bf16.msra.mxu0 %v501
    %601 = vmatprep.subr.bf16.mxu0 0
    %602 = vmatpush1.bf16.msra.mxu0 %v502
    %603 = vmatprep.subr.bf16.mxu0 0
    %604 = vmatpush1.bf16.msra.mxu0 %v503
    %605 = vmatprep.subr.bf16.mxu0 0
    %606 = vmatpush1.bf16.msra.mxu0 %v504
    %607 = vmatprep.subr.bf16.mxu0 0
    %608 = vmatpush1.bf16.msra.mxu0 %v505
    %609 = vmatprep.subr.bf16.mxu0 0
    %610 = vmatpush1.bf16.msra.mxu0 %v506
    %611 = vmatprep.mubr.bf16.mxu0 %v275
    %612 = vmatmul.mubr.bf16.gmra.mrb[0].mxu0 %v274
    %v613 = vpop.f32.mrb[0].mxu0
    %v614 = vadd.f32 %v574, %v613
    %v615 = vpop.f32.mrb[0].mxu0
    %v616 = vpop.f32.mrb[0].mxu0
    %v617 = vpop.f32.mrb[0].mxu0
    %618 = vdwg.mxu0
    %619 = vst [vmem:[%s5] sm:$0xff] %v614
    // Predicated region
    $region34: #{hdcnn_classifier_forward.1} parent=1 // pred_check
      _
    $region35: #{hdcnn_classifier_forward.1} parent=1 // pred_check_branch
      %621 = sbr.rel (0) target = $region37
    $region36: #{hdcnn_classifier_forward.1} parent=1 // pred_region
      _
    $region37: #{hdcnn_classifier_forward.1} parent=1 // pred_fallthru
      _
    // Predicated region
    $region38: #{hdcnn_classifier_forward.1} parent=1 // pred_check
      _
    $region39: #{hdcnn_classifier_forward.1} parent=1 // pred_check_branch
      %623 = sbr.rel (0) target = $region41
    $region40: #{hdcnn_classifier_forward.1} parent=1 // pred_region
      _
    $region41: #{hdcnn_classifier_forward.1} parent=1 // pred_fallthru
      _
    %624 = vsyncpa [#allocation3], 1
    %625 = vsyncpa [#allocation5], 1

</llo_original>
